<compile_context>
chip_gen: v5e
topology: v5e:2x2
jax: 0.10.0
libtpu: 0.0.40
codegen_flags: <defaults>
</compile_context>

<pallas_src>
import functools

import jax
import jax.numpy as jnp
import numpy as np
from jax.experimental import pallas as pl
from jax.experimental.pallas import tpu as pltpu

LANE = 128
SUBLANE = 8
_DEFAULT_ROWS_PER_CHUNK = 1024  # 1024 * 128 = 131072 ROIs per grid step


def _score_loss_log_kernel(n_ref, gt_ref, rois_ref, score_ref, out_ref, *, num_gt, tnr):
    """One grid step: a lane-dense chunk of ROIs against all gt boxes.

    n_ref:     SMEM (1,) i32          -- scalar-prefetch: number of valid ROIs
    gt_ref:    SMEM (5 * num_gt,) f32 -- per gt: x1, y1, x2, y2, area
    rois_ref:  VMEM (4, tnr, 128) f32 -- coordinate planes, ROI index lane-dense
    score_ref: VMEM (tnr, 128) f32
    out_ref:   VMEM (1, 8, 128) f32   -- per-chunk partial-sum vreg
    """
    pid = pl.program_id(0)
    last = pl.num_programs(0) - 1

    x1 = rois_ref[0]                      # (tnr, 128)
    y1 = rois_ref[1]
    x2 = rois_ref[2]
    y2 = rois_ref[3]
    area_r = (x2 - x1) * (y2 - y1)

    def _overlap(g):
        gx1 = gt_ref[5 * g + 0]
        gy1 = gt_ref[5 * g + 1]
        gx2 = gt_ref[5 * g + 2]
        gy2 = gt_ref[5 * g + 3]
        g_area = gt_ref[5 * g + 4]
        iw = jnp.maximum(jnp.minimum(x2, gx2) - jnp.maximum(x1, gx1), 0.0)
        ih = jnp.maximum(jnp.minimum(y2, gy2) - jnp.maximum(y1, gy1), 0.0)
        inter = iw * ih
        union = area_r + g_area - inter
        return inter, union

    # gt 0 initializes the running best (no -inf tile materialization); remaining
    # gts fold in with a divide-free argmax: inter/union > bi/bu  <=>  inter*bu > bi*union
    # (unions are strictly positive for positive-area boxes), all on the VPU.
    best_inter, best_union = _overlap(0)
    for g in range(1, num_gt):
        inter, union = _overlap(g)
        take = inter * best_union > best_inter * union
        best_inter = jnp.where(take, inter, best_inter)
        best_union = jnp.where(take, union, best_union)

    score = score_ref[...]               # (tnr, 128)
    # Fused: |log(score) - log(max_iou)| == |log(score * best_union / best_inter)|.
    # Exactly one divide + one log per element hit the EUP.
    abs_diff = jnp.abs(jnp.log(score * best_union / best_inter))

    def _partial(vals):
        # (tnr, 128) -> (8, 128) tile-wise partial sums: pure vreg+vreg adds, no
        # cross-lane/sublane reduce in the hot loop (final reduce is in the wrapper).
        return jnp.sum(vals.reshape(tnr // SUBLANE, SUBLANE, LANE), axis=0)[None]

    @pl.when(pid != last)
    def _body():
        out_ref[...] = _partial(abs_diff)

    @pl.when(pid == last)
    def _tail():
        # Only the tail chunk can contain padded ROI slots; mask them out here
        # (padded slots hold a dummy unit box / unit score).
        row = jax.lax.broadcasted_iota(jnp.int32, abs_diff.shape, 0)
        col = jax.lax.broadcasted_iota(jnp.int32, abs_diff.shape, 1)
        thresh = n_ref[0] - pid * (tnr * LANE)      # scalar threshold, local index space
        contrib = jnp.where(row * LANE + col < thresh, abs_diff, 0.0)
        out_ref[...] = _partial(contrib)


@functools.partial(jax.jit, static_argnames=("rows_per_chunk",))
def ubr_score_loss_log(rois, score_pred, gt_box, *, rows_per_chunk=_DEFAULT_ROWS_PER_CHUNK):
    """rois: (N, 4), score_pred: (N,) or (N, 1), gt_box: (G, 4). Returns scalar f32 loss."""
    n = int(rois.shape[0])
    g = int(gt_box.shape[0])

    # Tile geometry: rows of 128 lanes, row-count always a multiple of 8 (sublane).
    rows_per_chunk = max(SUBLANE, (rows_per_chunk // SUBLANE) * SUBLANE)
    nr = max(1, -(-n // LANE))
    if nr <= rows_per_chunk:
        tnr = -(-nr // SUBLANE) * SUBLANE
        nr_pad = tnr
    else:
        tnr = rows_per_chunk
        nr_pad = -(-nr // tnr) * tnr
    n_pad = nr_pad * LANE
    num_chunks = nr_pad // tnr

    rois_f = rois.astype(jnp.float32)
    score_f = score_pred.astype(jnp.float32).reshape(n)

    # Pad with a harmless unit box / unit score (finite everywhere); masked in-kernel.
    # TODO(synk): produce rois/scores already in this padded plane layout upstream to
    # avoid the extra HBM pass of this pad+transpose (it roughly doubles HBM traffic).
    pad_n = n_pad - n
    pad_box = jnp.tile(jnp.asarray([[0.0, 0.0, 1.0, 1.0]], jnp.float32), (pad_n, 1))
    rois_p = jnp.concatenate([rois_f, pad_box], axis=0)                 # (n_pad, 4)
    rois_planes = rois_p.T.reshape(4, nr_pad, LANE)                     # (4, nr_pad, 128)
    score_p = jnp.concatenate(
        [score_f, jnp.ones((pad_n,), jnp.float32)], axis=0
    ).reshape(nr_pad, LANE)                                             # (nr_pad, 128)

    # gt table for SMEM: [x1, y1, x2, y2, area] per gt, flattened 1D.
    gt_f = gt_box.astype(jnp.float32)
    gt_area = (gt_f[:, 2] - gt_f[:, 0]) * (gt_f[:, 3] - gt_f[:, 1])
    gt_aug = jnp.concatenate([gt_f, gt_area[:, None]], axis=1).reshape(-1)  # (5*G,)

    n_arr = jnp.asarray([n], dtype=jnp.int32)   # scalar-prefetch arg (not baked into kernel)

    kernel = functools.partial(_score_loss_log_kernel, num_gt=g, tnr=tnr)

    partials = pl.pallas_call(
        kernel,
        out_shape=jax.ShapeDtypeStruct((num_chunks, SUBLANE, LANE), jnp.float32),
        grid_spec=pltpu.PrefetchScalarGridSpec(
            num_scalar_prefetch=1,
            grid=(num_chunks,),
            in_specs=[
                pl.BlockSpec(memory_space=pltpu.MemorySpace.SMEM),           # gt table -> SMEM
                pl.BlockSpec((4, tnr, LANE), lambda i, n_ref: (0, i, 0)),    # ROI coord planes
                pl.BlockSpec((tnr, LANE), lambda i, n_ref: (i, 0)),          # scores
            ],
            out_specs=pl.BlockSpec((1, SUBLANE, LANE), lambda i, n_ref: (i, 0, 0)),
        ),
        compiler_params=pltpu.CompilerParams(
            dimension_semantics=("parallel",),   # chunks are independent -> both TCs on v7x
        ),
    )(n_arr, gt_aug, rois_planes, score_p)

    # Tiny epilogue: single cross-lane reduce over (num_chunks, 8, 128) + mean divide.
    return jnp.sum(partials) / jnp.float32(n)


def _reference_loss(rois, score_pred, gt_box):
    # Pure-JAX transcription of jaccard() + F.l1_loss for verification.
    n = rois.shape[0]
    max_xy = jnp.minimum(rois[:, None, 2:], gt_box[None, :, 2:])
    min_xy = jnp.maximum(rois[:, None, :2], gt_box[None, :, :2])
    inter_wh = jnp.maximum(max_xy - min_xy, 0.0)
    inter = inter_wh[..., 0] * inter_wh[..., 1]
    area_a = ((rois[:, 2] - rois[:, 0]) * (rois[:, 3] - rois[:, 1]))[:, None]
    area_b = ((gt_box[:, 2] - gt_box[:, 0]) * (gt_box[:, 3] - gt_box[:, 1]))[None, :]
    iou = inter / (area_a + area_b - inter)
    max_iou = jnp.max(iou, axis=1)
    return jnp.mean(jnp.abs(jnp.log(score_pred.reshape(n)) - jnp.log(max_iou)))


def _make_problem(key, num_gt, num_rois):
    k_gt, k_jit, k_score = jax.random.split(key, 3)
    cx = jax.random.uniform(k_gt, (num_gt, 1), minval=20.0, maxval=44.0)
    cy = jax.random.uniform(jax.random.fold_in(k_gt, 1), (num_gt, 1), minval=20.0, maxval=44.0)
    w = jax.random.uniform(jax.random.fold_in(k_gt, 2), (num_gt, 1), minval=8.0, maxval=16.0)
    h = jax.random.uniform(jax.random.fold_in(k_gt, 3), (num_gt, 1), minval=8.0, maxval=16.0)
    gt_box = jnp.concatenate(
        [cx - w / 2, cy - h / 2, cx + w / 2, cy + h / 2], axis=1
    ).astype(jnp.float32)                                               # (G, 4)

    reps = -(-num_rois // num_gt)
    base = jnp.tile(gt_box, (reps, 1))[:num_rois]                       # (N, 4)
    jitter = jax.random.uniform(k_jit, base.shape, minval=-2.0, maxval=2.0)
    rois = (base + jitter).astype(jnp.float32)

    score_pred = jax.random.uniform(
        k_score, (num_rois, 1), minval=0.05, maxval=0.95
    ).astype(jnp.float32)
    return rois, score_pred, gt_box


if __name__ == "__main__":
    key = jax.random.PRNGKey(0)
    k_small, k_big = jax.random.split(key)

    # Small problem (matches the original module's typical toy shapes).
    rois, score_pred, gt_box = _make_problem(k_small, num_gt=4, num_rois=8)
    out = jax.block_until_ready(ubr_score_loss_log(rois, score_pred, gt_box))
    ref = jax.block_until_ready(_reference_loss(rois, score_pred, gt_box))
    assert np.allclose(np.asarray(out), np.asarray(ref), rtol=1e-4, atol=1e-5), (out, ref)

    # Larger problem with a tiny rows_per_chunk to exercise the multi-chunk
    # parallel grid / tail-only masking / per-chunk partial-sum path.
    rois2, score2, gt2 = _make_problem(k_big, num_gt=6, num_rois=3000)
    out2 = jax.block_until_ready(ubr_score_loss_log(rois2, score2, gt2, rows_per_chunk=8))
    ref2 = jax.block_until_ready(_reference_loss(rois2, score2, gt2))
    assert np.allclose(np.asarray(out2), np.asarray(ref2), rtol=1e-4, atol=1e-5), (out2, ref2)

    print("KERNEL_OK")
</pallas_src>

<mosaic_0001>
module attributes {stable_mosaic.version = 11 : i64} {
  func.func @_score_loss_log_kernel(%arg0: i32, %arg1: memref<1xi32, #tpu.memory_space<smem>>, %arg2: memref<20xf32, #tpu.memory_space<smem>>, %arg3: memref<4x8x128xf32, #tpu.memory_space<vmem>>, %arg4: memref<8x128xf32, #tpu.memory_space<vmem>>, %arg5: memref<1x8x128xf32, #tpu.memory_space<vmem>>) attributes {dimension_semantics = [#tpu.dimension_semantics<parallel>], iteration_bounds = array<i64: 1>, scalar_prefetch = 1 : i64, scratch_operands = 0 : i64, tpu.core_type = #tpu.core_type<tc>, window_params = [{transform_indices = @transform_0, window_bounds = array<i64: 20>}, {transform_indices = @transform_1, window_bounds = array<i64: 4, 8, 128>}, {transform_indices = @transform_2, window_bounds = array<i64: 8, 128>}, {transform_indices = @transform_3, window_bounds = array<i64: 1, 8, 128>}]} {
    %c0 = arith.constant 0 : index
    %c0_0 = arith.constant 0 : index
    %c0_1 = arith.constant 0 : index
    %0 = vector.load %arg3[%c0, %c0_0, %c0_1] : memref<4x8x128xf32, #tpu.memory_space<vmem>>, vector<1x8x128xf32>
    %1 = vector.shape_cast %0 : vector<1x8x128xf32> to vector<8x128xf32>
    %c1 = arith.constant 1 : index
    %c0_2 = arith.constant 0 : index
    %c0_3 = arith.constant 0 : index
    %2 = vector.load %arg3[%c1, %c0_2, %c0_3] : memref<4x8x128xf32, #tpu.memory_space<vmem>>, vector<1x8x128xf32>
    %3 = vector.shape_cast %2 : vector<1x8x128xf32> to vector<8x128xf32>
    %c2 = arith.constant 2 : index
    %c0_4 = arith.constant 0 : index
    %c0_5 = arith.constant 0 : index
    %4 = vector.load %arg3[%c2, %c0_4, %c0_5] : memref<4x8x128xf32, #tpu.memory_space<vmem>>, vector<1x8x128xf32>
    %5 = vector.shape_cast %4 : vector<1x8x128xf32> to vector<8x128xf32>
    %c3 = arith.constant 3 : index
    %c0_6 = arith.constant 0 : index
    %c0_7 = arith.constant 0 : index
    %6 = vector.load %arg3[%c3, %c0_6, %c0_7] : memref<4x8x128xf32, #tpu.memory_space<vmem>>, vector<1x8x128xf32>
    %7 = vector.shape_cast %6 : vector<1x8x128xf32> to vector<8x128xf32>
    %8 = arith.subf %5, %1 : vector<8x128xf32>
    %9 = arith.subf %7, %3 : vector<8x128xf32>
    %10 = arith.mulf %8, %9 : vector<8x128xf32>
    %c0_8 = arith.constant 0 : index
    %11 = memref.load %arg2[%c0_8] : memref<20xf32, #tpu.memory_space<smem>>
    %c1_9 = arith.constant 1 : index
    %12 = memref.load %arg2[%c1_9] : memref<20xf32, #tpu.memory_space<smem>>
    %c2_10 = arith.constant 2 : index
    %13 = memref.load %arg2[%c2_10] : memref<20xf32, #tpu.memory_space<smem>>
    %c3_11 = arith.constant 3 : index
    %14 = memref.load %arg2[%c3_11] : memref<20xf32, #tpu.memory_space<smem>>
    %c4 = arith.constant 4 : index
    %15 = memref.load %arg2[%c4] : memref<20xf32, #tpu.memory_space<smem>>
    %16 = vector.broadcast %13 : f32 to vector<8x128xf32>
    %17 = arith.minimumf %5, %16 : vector<8x128xf32>
    %18 = vector.broadcast %11 : f32 to vector<8x128xf32>
    %19 = arith.maximumf %1, %18 : vector<8x128xf32>
    %20 = arith.subf %17, %19 : vector<8x128xf32>
    %cst = arith.constant 0.000000e+00 : f32
    %21 = vector.broadcast %cst : f32 to vector<8x128xf32>
    %22 = arith.maximumf %20, %21 : vector<8x128xf32>
    %23 = vector.broadcast %14 : f32 to vector<8x128xf32>
    %24 = arith.minimumf %7, %23 : vector<8x128xf32>
    %25 = vector.broadcast %12 : f32 to vector<8x128xf32>
    %26 = arith.maximumf %3, %25 : vector<8x128xf32>
    %27 = arith.subf %24, %26 : vector<8x128xf32>
    %cst_12 = arith.constant 0.000000e+00 : f32
    %28 = vector.broadcast %cst_12 : f32 to vector<8x128xf32>
    %29 = arith.maximumf %27, %28 : vector<8x128xf32>
    %30 = arith.mulf %22, %29 : vector<8x128xf32>
    %31 = vector.broadcast %15 : f32 to vector<8x128xf32>
    %32 = arith.addf %10, %31 : vector<8x128xf32>
    %33 = arith.subf %32, %30 : vector<8x128xf32>
    %c5 = arith.constant 5 : index
    %34 = memref.load %arg2[%c5] : memref<20xf32, #tpu.memory_space<smem>>
    %c6 = arith.constant 6 : index
    %35 = memref.load %arg2[%c6] : memref<20xf32, #tpu.memory_space<smem>>
    %c7 = arith.constant 7 : index
    %36 = memref.load %arg2[%c7] : memref<20xf32, #tpu.memory_space<smem>>
    %c8 = arith.constant 8 : index
    %37 = memref.load %arg2[%c8] : memref<20xf32, #tpu.memory_space<smem>>
    %c9 = arith.constant 9 : index
    %38 = memref.load %arg2[%c9] : memref<20xf32, #tpu.memory_space<smem>>
    %39 = vector.broadcast %36 : f32 to vector<8x128xf32>
    %40 = arith.minimumf %5, %39 : vector<8x128xf32>
    %41 = vector.broadcast %34 : f32 to vector<8x128xf32>
    %42 = arith.maximumf %1, %41 : vector<8x128xf32>
    %43 = arith.subf %40, %42 : vector<8x128xf32>
    %cst_13 = arith.constant 0.000000e+00 : f32
    %44 = vector.broadcast %cst_13 : f32 to vector<8x128xf32>
    %45 = arith.maximumf %43, %44 : vector<8x128xf32>
    %46 = vector.broadcast %37 : f32 to vector<8x128xf32>
    %47 = arith.minimumf %7, %46 : vector<8x128xf32>
    %48 = vector.broadcast %35 : f32 to vector<8x128xf32>
    %49 = arith.maximumf %3, %48 : vector<8x128xf32>
    %50 = arith.subf %47, %49 : vector<8x128xf32>
    %cst_14 = arith.constant 0.000000e+00 : f32
    %51 = vector.broadcast %cst_14 : f32 to vector<8x128xf32>
    %52 = arith.maximumf %50, %51 : vector<8x128xf32>
    %53 = arith.mulf %45, %52 : vector<8x128xf32>
    %54 = vector.broadcast %38 : f32 to vector<8x128xf32>
    %55 = arith.addf %10, %54 : vector<8x128xf32>
    %56 = arith.subf %55, %53 : vector<8x128xf32>
    %57 = arith.mulf %53, %33 : vector<8x128xf32>
    %58 = arith.mulf %30, %56 : vector<8x128xf32>
    %59 = arith.cmpf ogt, %57, %58 : vector<8x128xf32>
    %60 = arith.select %59, %53, %30 : vector<8x128xi1>, vector<8x128xf32>
    %61 = arith.select %59, %56, %33 : vector<8x128xi1>, vector<8x128xf32>
    %c10 = arith.constant 10 : index
    %62 = memref.load %arg2[%c10] : memref<20xf32, #tpu.memory_space<smem>>
    %c11 = arith.constant 11 : index
    %63 = memref.load %arg2[%c11] : memref<20xf32, #tpu.memory_space<smem>>
    %c12 = arith.constant 12 : index
    %64 = memref.load %arg2[%c12] : memref<20xf32, #tpu.memory_space<smem>>
    %c13 = arith.constant 13 : index
    %65 = memref.load %arg2[%c13] : memref<20xf32, #tpu.memory_space<smem>>
    %c14 = arith.constant 14 : index
    %66 = memref.load %arg2[%c14] : memref<20xf32, #tpu.memory_space<smem>>
    %67 = vector.broadcast %64 : f32 to vector<8x128xf32>
    %68 = arith.minimumf %5, %67 : vector<8x128xf32>
    %69 = vector.broadcast %62 : f32 to vector<8x128xf32>
    %70 = arith.maximumf %1, %69 : vector<8x128xf32>
    %71 = arith.subf %68, %70 : vector<8x128xf32>
    %cst_15 = arith.constant 0.000000e+00 : f32
    %72 = vector.broadcast %cst_15 : f32 to vector<8x128xf32>
    %73 = arith.maximumf %71, %72 : vector<8x128xf32>
    %74 = vector.broadcast %65 : f32 to vector<8x128xf32>
    %75 = arith.minimumf %7, %74 : vector<8x128xf32>
    %76 = vector.broadcast %63 : f32 to vector<8x128xf32>
    %77 = arith.maximumf %3, %76 : vector<8x128xf32>
    %78 = arith.subf %75, %77 : vector<8x128xf32>
    %cst_16 = arith.constant 0.000000e+00 : f32
    %79 = vector.broadcast %cst_16 : f32 to vector<8x128xf32>
    %80 = arith.maximumf %78, %79 : vector<8x128xf32>
    %81 = arith.mulf %73, %80 : vector<8x128xf32>
    %82 = vector.broadcast %66 : f32 to vector<8x128xf32>
    %83 = arith.addf %10, %82 : vector<8x128xf32>
    %84 = arith.subf %83, %81 : vector<8x128xf32>
    %85 = arith.mulf %81, %61 : vector<8x128xf32>
    %86 = arith.mulf %60, %84 : vector<8x128xf32>
    %87 = arith.cmpf ogt, %85, %86 : vector<8x128xf32>
    %88 = arith.select %87, %81, %60 : vector<8x128xi1>, vector<8x128xf32>
    %89 = arith.select %87, %84, %61 : vector<8x128xi1>, vector<8x128xf32>
    %c15 = arith.constant 15 : index
    %90 = memref.load %arg2[%c15] : memref<20xf32, #tpu.memory_space<smem>>
    %c16 = arith.constant 16 : index
    %91 = memref.load %arg2[%c16] : memref<20xf32, #tpu.memory_space<smem>>
    %c17 = arith.constant 17 : index
    %92 = memref.load %arg2[%c17] : memref<20xf32, #tpu.memory_space<smem>>
    %c18 = arith.constant 18 : index
    %93 = memref.load %arg2[%c18] : memref<20xf32, #tpu.memory_space<smem>>
    %c19 = arith.constant 19 : index
    %94 = memref.load %arg2[%c19] : memref<20xf32, #tpu.memory_space<smem>>
    %95 = vector.broadcast %92 : f32 to vector<8x128xf32>
    %96 = arith.minimumf %5, %95 : vector<8x128xf32>
    %97 = vector.broadcast %90 : f32 to vector<8x128xf32>
    %98 = arith.maximumf %1, %97 : vector<8x128xf32>
    %99 = arith.subf %96, %98 : vector<8x128xf32>
    %cst_17 = arith.constant 0.000000e+00 : f32
    %100 = vector.broadcast %cst_17 : f32 to vector<8x128xf32>
    %101 = arith.maximumf %99, %100 : vector<8x128xf32>
    %102 = vector.broadcast %93 : f32 to vector<8x128xf32>
    %103 = arith.minimumf %7, %102 : vector<8x128xf32>
    %104 = vector.broadcast %91 : f32 to vector<8x128xf32>
    %105 = arith.maximumf %3, %104 : vector<8x128xf32>
    %106 = arith.subf %103, %105 : vector<8x128xf32>
    %cst_18 = arith.constant 0.000000e+00 : f32
    %107 = vector.broadcast %cst_18 : f32 to vector<8x128xf32>
    %108 = arith.maximumf %106, %107 : vector<8x128xf32>
    %109 = arith.mulf %101, %108 : vector<8x128xf32>
    %110 = vector.broadcast %94 : f32 to vector<8x128xf32>
    %111 = arith.addf %10, %110 : vector<8x128xf32>
    %112 = arith.subf %111, %109 : vector<8x128xf32>
    %113 = arith.mulf %109, %89 : vector<8x128xf32>
    %114 = arith.mulf %88, %112 : vector<8x128xf32>
    %115 = arith.cmpf ogt, %113, %114 : vector<8x128xf32>
    %116 = arith.select %115, %109, %88 : vector<8x128xi1>, vector<8x128xf32>
    %117 = arith.select %115, %112, %89 : vector<8x128xi1>, vector<8x128xf32>
    %c0_19 = arith.constant 0 : index
    %c0_20 = arith.constant 0 : index
    %118 = vector.load %arg4[%c0_19, %c0_20] : memref<8x128xf32, #tpu.memory_space<vmem>>, vector<8x128xf32>
    %119 = arith.mulf %118, %117 : vector<8x128xf32>
    %120 = arith.divf %119, %116 : vector<8x128xf32>
    %121 = math.log %120 : vector<8x128xf32>
    %122 = math.absf %121 : vector<8x128xf32>
    %c0_i32 = arith.constant 0 : i32
    %123 = arith.cmpi ne, %arg0, %c0_i32 : i32
    %124 = arith.extui %123 : i1 to i32
    %c0_i32_21 = arith.constant 0 : i32
    %125 = arith.cmpi ne, %124, %c0_i32_21 : i32
    scf.if %125 {
      %129 = vector.shape_cast %122 : vector<8x128xf32> to vector<1x8x128xf32>
      %cst_24 = arith.constant dense<0.000000e+00> : vector<8x128xf32>
      %130 = vector.multi_reduction <add>, %129, %cst_24 [0] : vector<1x8x128xf32> to vector<8x128xf32>
      %131 = vector.shape_cast %130 : vector<8x128xf32> to vector<1x8x128xf32>
      %c0_25 = arith.constant 0 : index
      %c0_26 = arith.constant 0 : index
      %c0_27 = arith.constant 0 : index
      %132 = vector.load %arg5[%c0_25, %c0_26, %c0_27] : memref<1x8x128xf32, #tpu.memory_space<vmem>>, vector<1x8x128xf32>
      tpu.vector_store %arg5[%c0_25, %c0_26, %c0_27], %131 {strides = array<i32>} : memref<1x8x128xf32, #tpu.memory_space<vmem>>, vector<1x8x128xf32>,
    } else {
    }
    %c0_i32_22 = arith.constant 0 : i32
    %126 = arith.cmpi eq, %arg0, %c0_i32_22 : i32
    %127 = arith.extui %126 : i1 to i32
    %c0_i32_23 = arith.constant 0 : i32
    %128 = arith.cmpi ne, %127, %c0_i32_23 : i32
    scf.if %128 {
      %129 = tpu.iota {dimensions = array<i32: 0>} : vector<8x128xi32>
      %130 = tpu.iota {dimensions = array<i32: 1>} : vector<8x128xi32>
      %c0_24 = arith.constant 0 : index
      %131 = memref.load %arg1[%c0_24] : memref<1xi32, #tpu.memory_space<smem>>
      %c1024_i32 = arith.constant 1024 : i32
      %132 = arith.muli %arg0, %c1024_i32 : i32
      %133 = arith.subi %131, %132 : i32
      %c128_i32 = arith.constant 128 : i32
      %134 = vector.broadcast %c128_i32 : i32 to vector<8x128xi32>
      %135 = arith.muli %129, %134 : vector<8x128xi32>
      %136 = arith.addi %135, %130 : vector<8x128xi32>
      %137 = vector.broadcast %133 : i32 to vector<8x128xi32>
      %138 = arith.cmpi slt, %136, %137 : vector<8x128xi32>
      %cst_25 = arith.constant 0.000000e+00 : f32
      %139 = vector.broadcast %cst_25 : f32 to vector<8x128xf32>
      %140 = arith.select %138, %122, %139 : vector<8x128xi1>, vector<8x128xf32>
      %141 = vector.shape_cast %140 : vector<8x128xf32> to vector<1x8x128xf32>
      %cst_26 = arith.constant dense<0.000000e+00> : vector<8x128xf32>
      %142 = vector.multi_reduction <add>, %141, %cst_26 [0] : vector<1x8x128xf32> to vector<8x128xf32>
      %143 = vector.shape_cast %142 : vector<8x128xf32> to vector<1x8x128xf32>
      %c0_27 = arith.constant 0 : index
      %c0_28 = arith.constant 0 : index
      %c0_29 = arith.constant 0 : index
      %144 = vector.load %arg5[%c0_27, %c0_28, %c0_29] : memref<1x8x128xf32, #tpu.memory_space<vmem>>, vector<1x8x128xf32>
      tpu.vector_store %arg5[%c0_27, %c0_28, %c0_29], %143 {strides = array<i32>} : memref<1x8x128xf32, #tpu.memory_space<vmem>>, vector<1x8x128xf32>,
    } else {
    }
    return
  }
  func.func @transform_0(%arg0: i32, %arg1: memref<1xi32, #tpu.memory_space<smem>>) -> i32 {
    %c0_i32 = arith.constant 0 : i32
    %c0_i32_0 = arith.constant 0 : i32
    return %c0_i32 : i32
  }
  func.func @transform_1(%arg0: i32, %arg1: memref<1xi32, #tpu.memory_space<smem>>) -> (i32, i32, i32) {
    %c0_i32 = arith.constant 0 : i32
    %c0_i32_0 = arith.constant 0 : i32
    %c0_i32_1 = arith.constant 0 : i32
    return %c0_i32, %arg0, %c0_i32_0 : i32, i32, i32
  }
  func.func @transform_2(%arg0: i32, %arg1: memref<1xi32, #tpu.memory_space<smem>>) -> (i32, i32) {
    %c0_i32 = arith.constant 0 : i32
    %c0_i32_0 = arith.constant 0 : i32
    return %arg0, %c0_i32 : i32, i32
  }
  func.func @transform_3(%arg0: i32, %arg1: memref<1xi32, #tpu.memory_space<smem>>) -> (i32, i32, i32) {
    %c0_i32 = arith.constant 0 : i32
    %c0_i32_0 = arith.constant 0 : i32
    %c0_i32_1 = arith.constant 0 : i32
    return %arg0, %c0_i32, %c0_i32_0 : i32, i32, i32
  }
}

</mosaic_0001>

<llo_original>
// kernel: ubr_score_loss_log.1
$region0: #{ubr_score_loss_log.1}
  #allocation0 [shape = 'u32[]', space=smem, size = 0x4, offset = 0x4, fixed_abs, tag = 'smem constant byte address 0x4 - core index']
  #allocation1 [shape = 'u32[72,128]{1,0:T(1,128)}', space=vmem, size = 0x9000, scoped, tag = 'internal scratch']
  #allocation2 [shape = 's32[1]{0}', space=sflag, size = 0x4, scoped, tag = 'scoped memory for ubr_score_loss_log.1']
  #allocation3 [shape = 's32[1]{0:T(128)S(6)}', space=smem, size = 0x200, scoped, tag = 'prefetched SMEM operand 0']
  %s0 = inlined_call_operand.<no memory space> [shape: s32[1], index: 0, kind: input, shape index: {}]
  %s1 = inlined_call_operand.vmem [shape: f32[20], index: 1, kind: input, shape index: {}]
  %s2 = inlined_call_operand.vmem [shape: f32[4,8,128], index: 2, kind: input, shape index: {}]
  %s3 = inlined_call_operand.vmem [shape: f32[8,128], index: 3, kind: input, shape index: {}]
  %s4 = inlined_call_operand.vmem [shape: f32[1,8,128], index: 4, kind: output, shape index: {}]
  %s5 = sld [smem:[#allocation0]]
  $region34: #{ubr_score_loss_log.1} parent=0
    _
  %s7 = ssub.s32 1, %s5
  %s8 = scalar_select 0, %s7, %s5
  %9 = sst [smem:[#allocation3]] %s0
  $region1: #{ubr_score_loss_log.1} parent=0
    #allocation4 [shape = 'u8[512]{0}', space=smem, size = 0x200, scoped, tag = 'input window, operand 1, single buffered']
    #allocation5 [shape = 's32[1]{0}', space=sflag, size = 0x4, scoped, tag = 'scoped memory for ubr_score_loss_log.1']
    %10 = vsyncpa [#allocation5], 0
    // Predicated region
    $region2: #{ubr_score_loss_log.1} parent=1 // pred_check
      _
    $region3: #{ubr_score_loss_log.1} parent=1 // pred_check_branch
      %12 = sbr.rel (0) target = $region5
    $region4: #{ubr_score_loss_log.1} parent=1 // pred_region
      %14 = vsyncadd [#allocation5], 0
      %s16 = sshll.u32 %s1, 4
      %s17 = int_to_ptr.vmem [resolvable:$true] %s16
      %19 = dma.vmem_to_smem %s17, 16, [#allocation4], [#allocation5]
    $region5: #{ubr_score_loss_log.1} parent=1 // pred_fallthru
      _
    // Predicated region
    $region6: #{ubr_score_loss_log.1} parent=1 // pred_check
      _
    $region7: #{ubr_score_loss_log.1} parent=1 // pred_check_branch
      %21 = sbr.rel (0) target = $region9
    $region8: #{ubr_score_loss_log.1} parent=1 // pred_region
      _
    $region9: #{ubr_score_loss_log.1} parent=1 // pred_fallthru
      _
    // Predicated region
    $region10: #{ubr_score_loss_log.1} parent=1 // pred_check
      _
    $region11: #{ubr_score_loss_log.1} parent=1 // pred_check_branch
      %23 = sbr.rel (0) target = $region13
    $region12: #{ubr_score_loss_log.1} parent=1 // pred_region
      _
    $region13: #{ubr_score_loss_log.1} parent=1 // pred_fallthru
      _
    // Predicated region
    $region14: #{ubr_score_loss_log.1} parent=1 // pred_check
      _
    $region15: #{ubr_score_loss_log.1} parent=1 // pred_check_branch
      %25 = sbr.rel (0) target = $region17
    $region16: #{ubr_score_loss_log.1} parent=1 // pred_region
      %27 = dma.done [#allocation5], 16
    $region17: #{ubr_score_loss_log.1} parent=1 // pred_fallthru
      _
    %28 = sfence
    %v29 = vld [vmem:[%s2] sm:$0xff]
    %s30 = scalar_lea.vmem %s2, 8
    %v31 = vld [vmem:[%s30] sm:$0xff]
    %s32 = scalar_lea.vmem %s2, 16
    %v33 = vld [vmem:[%s32] sm:$0xff]
    %s34 = scalar_lea.vmem %s2, 24
    %v35 = vld [vmem:[%s34] sm:$0xff]
    %v36 = vsub.f32 %v33, %v29
    %v37 = vsub.f32 %v35, %v31
    %v38 = vmul.f32 %v36, %v37
    %s39 = sld [smem:[#allocation4]]
    %s40 = sld [smem:[#allocation4 + $0x1]]
    %s41 = sld [smem:[#allocation4 + $0x2]]
    %s42 = sld [smem:[#allocation4 + $0x3]]
    %s43 = sld [smem:[#allocation4 + $0x4]]
    %v44 = vstv %s41
    %v45 = vmin.f32 %v33, %v44
    %v46 = vstv %s39
    %v47 = vmax.f32 %v29, %v46
    %v48 = vsub.f32 %v45, %v47
    %v49 = vmax.f32 %v48, 0.0
    %v50 = vstv %s42
    %v51 = vmin.f32 %v35, %v50
    %v52 = vstv %s40
    %v53 = vmax.f32 %v31, %v52
    %v54 = vsub.f32 %v51, %v53
    %v55 = vmax.f32 %v54, 0.0
    %v56 = vmul.f32 %v49, %v55
    %v57 = vstv %s43
    %v58 = vadd.f32 %v38, %v57
    %v59 = vsub.f32 %v58, %v56
    %s60 = sld [smem:[#allocation4 + $0x5]]
    %s61 = sld [smem:[#allocation4 + $0x6]]
    %s62 = sld [smem:[#allocation4 + $0x7]]
    %s63 = sld [smem:[#allocation4 + $0x8]]
    %s64 = sld [smem:[#allocation4 + $0x9]]
    %v65 = vstv %s62
    %v66 = vmin.f32 %v33, %v65
    %v67 = vstv %s60
    %v68 = vmax.f32 %v29, %v67
    %v69 = vsub.f32 %v66, %v68
    %v70 = vmax.f32 %v69, 0.0
    %v71 = vstv %s63
    %v72 = vmin.f32 %v35, %v71
    %v73 = vstv %s61
    %v74 = vmax.f32 %v31, %v73
    %v75 = vsub.f32 %v72, %v74
    %v76 = vmax.f32 %v75, 0.0
    %v77 = vmul.f32 %v70, %v76
    %v78 = vstv %s64
    %v79 = vadd.f32 %v38, %v78
    %v80 = vsub.f32 %v79, %v77
    %v81 = vmul.f32 %v77, %v59
    %v82 = vmul.f32 %v56, %v80
    %vm83 = vcmp.gt.f32.partialorder %v81, %v82
    %v84 = vsel %vm83, %v77, %v56
    %v85 = vsel %vm83, %v80, %v59
    %s86 = sld [smem:[#allocation4 + $0xa]]
    %s87 = sld [smem:[#allocation4 + $0xb]]
    %s88 = sld [smem:[#allocation4 + $0xc]]
    %s89 = sld [smem:[#allocation4 + $0xd]]
    %s90 = sld [smem:[#allocation4 + $0xe]]
    %v91 = vstv %s88
    %v92 = vmin.f32 %v33, %v91
    %v93 = vstv %s86
    %v94 = vmax.f32 %v29, %v93
    %v95 = vsub.f32 %v92, %v94
    %v96 = vmax.f32 %v95, 0.0
    %v97 = vstv %s89
    %v98 = vmin.f32 %v35, %v97
    %v99 = vstv %s87
    %v100 = vmax.f32 %v31, %v99
    %v101 = vsub.f32 %v98, %v100
    %v102 = vmax.f32 %v101, 0.0
    %v103 = vmul.f32 %v96, %v102
    %v104 = vstv %s90
    %v105 = vadd.f32 %v38, %v104
    %v106 = vsub.f32 %v105, %v103
    %v107 = vmul.f32 %v103, %v85
    %v108 = vmul.f32 %v84, %v106
    %vm109 = vcmp.gt.f32.partialorder %v107, %v108
    %v110 = vsel %vm109, %v103, %v84
    %v111 = vsel %vm109, %v106, %v85
    %s112 = sld [smem:[#allocation4 + $0xf]]
    %s113 = sld [smem:[#allocation4 + $0x10]]
    %s114 = sld [smem:[#allocation4 + $0x11]]
    %s115 = sld [smem:[#allocation4 + $0x12]]
    %s116 = sld [smem:[#allocation4 + $0x13]]
    %v117 = vstv %s114
    %v118 = vmin.f32 %v33, %v117
    %v119 = vstv %s112
    %v120 = vmax.f32 %v29, %v119
    %v121 = vsub.f32 %v118, %v120
    %v122 = vmax.f32 %v121, 0.0
    %v123 = vstv %s115
    %v124 = vmin.f32 %v35, %v123
    %v125 = vstv %s113
    %v126 = vmax.f32 %v31, %v125
    %v127 = vsub.f32 %v124, %v126
    %v128 = vmax.f32 %v127, 0.0
    %v129 = vmul.f32 %v122, %v128
    %v130 = vstv %s116
    %v131 = vadd.f32 %v38, %v130
    %v132 = vsub.f32 %v131, %v129
    %v133 = vmul.f32 %v129, %v111
    %v134 = vmul.f32 %v110, %v132
    %vm135 = vcmp.gt.f32.partialorder %v133, %v134
    %v136 = vsel %vm135, %v129, %v110
    %v137 = vsel %vm135, %v132, %v111
    %v138 = vld [vmem:[%s3] sm:$0xff]
    %v139 = vmul.f32 %v138, %v137
    %v140 = vrcp.pop %v136
    %v141 = vmul.f32 %v136, %v140
    %v142 = vsub.f32 1.0, %v141
    %v143 = vmul.f32 %v140, %v142
    %v144 = vadd.f32 %v140, %v143
    %vm145 = vweird.f32 %v136
    %vm146 = vweird.f32 %v140
    %vm147 = vmor %vm145, %vm146
    %v148 = vsel %vm147, %v140, %v144
    %v149 = vand.u32 2147483647, %v136
    %vm150 = vcmp.eq.f32.partialorder %v149, 8.507059e+37
    %v151 = vand.u32 %v136, 2147483648
    %v152 = vor.u32 1.1754944e-38, %v151
    %v153 = vsel %vm150, %v152, %v148
    %v154 = vmul.f32 %v139, %v153
    %v155 = vlog2.pop %v154
    %v156 = vmul.f32 %v155, 0.6931472
    %v157 = vand.u32 2147483647, %v156
    %p158 = scmp.ne.s32.totalorder 0, 0
    // Predicated region
    $region18: #{ubr_score_loss_log.1} parent=1 // pred_check
      %p159 = pneg %p158
    $region19: #{ubr_score_loss_log.1} parent=1 // pred_check_branch
      %161 = sbr.rel (%p159) target = $region21
    $region20: #{ubr_score_loss_log.1} parent=1 // pred_region
      %v162 = vadd.f32 %v157, 0.0
      %163 = vst [vmem:[%s4] sm:$0xff] %v162
    $region21: #{ubr_score_loss_log.1} parent=1 // pred_fallthru
      _
    %p164 = scmp.eq.s32.totalorder 0, 0
    // Predicated region
    $region22: #{ubr_score_loss_log.1} parent=1 // pred_check
      %p165 = pneg %p164
    $region23: #{ubr_score_loss_log.1} parent=1 // pred_check_branch
      %167 = sbr.rel (%p165) target = $region25
    $region24: #{ubr_score_loss_log.1} parent=1 // pred_region
      %v168 = vlaneseq
      %v169 = vshrl.u32 %v168, 7
      %v170 = vlaneseq
      %v171 = vand.u32 %v170, 127
      %s172 = sld [smem:[#allocation3]]
      %s173 = smul.u32 0, 1024
      %s174 = ssub.s32 %s172, %s173
      %v175 = vmul.u32 %v169, 128
      %v176 = vadd.s32 %v175, %v171
      %v177 = vstv %s174
      %vm178 = vcmp.lt.s32.totalorder %v176, %v177
      %v179 = vsel %vm178, %v157, 0.0
      %v180 = vadd.f32 %v179, 0.0
      %181 = vst [vmem:[%s4] sm:$0xff] %v180
    $region25: #{ubr_score_loss_log.1} parent=1 // pred_fallthru
      _
    // Predicated region
    $region26: #{ubr_score_loss_log.1} parent=1 // pred_check
      _
    $region27: #{ubr_score_loss_log.1} parent=1 // pred_check_branch
      %183 = sbr.rel (0) target = $region29
    $region28: #{ubr_score_loss_log.1} parent=1 // pred_region
      _
    $region29: #{ubr_score_loss_log.1} parent=1 // pred_fallthru
      _
    // Predicated region
    $region30: #{ubr_score_loss_log.1} parent=1 // pred_check
      _
    $region31: #{ubr_score_loss_log.1} parent=1 // pred_check_branch
      %185 = sbr.rel (0) target = $region33
    $region32: #{ubr_score_loss_log.1} parent=1 // pred_region
      _
    $region33: #{ubr_score_loss_log.1} parent=1 // pred_fallthru
      _
    %186 = vsyncpa [#allocation5], 1

</llo_original>
